<compile_context>
chip_gen: v7x
topology: tpu7x:2x2x1
jax: 0.10.0
libtpu: 0.0.40
codegen_flags: <defaults>
</compile_context>

<pallas_src>
import jax
import jax.numpy as jnp
from jax.experimental import pallas as pl
from jax.experimental.pallas import tpu as pltpu


def _round_up(n, m):
    return ((n + m - 1) // m) * m


def _cdiv(a, b):
    return -(-a // b)


def _mlp_kernel(x_ref, w1_ref, b1_ref, w2_ref, b2_ref, w3_ref, b3_ref, o_ref):
    # fc1: cast the streamed f32 x tile to bf16 in-kernel, MXU matmul with f32
    # accumulation; bias + ReLU stay in f32.
    x = x_ref[...].astype(w1_ref.dtype)
    h1 = jnp.dot(x, w1_ref[...], preferred_element_type=jnp.float32)
    h1 = jnp.maximum(h1 + b1_ref[...], 0.0)

    # fc2 + ReLU (bf16 operands, f32 accumulation).
    h2 = jnp.dot(h1.astype(w2_ref.dtype), w2_ref[...],
                 preferred_element_type=jnp.float32)
    h2 = jnp.maximum(h2 + b2_ref[...], 0.0)

    # fc3 (tiny (h2, 1) head, kept in f32 for accuracy; no activation).
    out = jnp.dot(h2, w3_ref[...], preferred_element_type=jnp.float32)
    o_ref[...] = (out + b3_ref[...]).astype(o_ref.dtype)


def prepare_params(params, compute_dtype=jnp.bfloat16):
    """One-time dtype preparation (hoisted out of the per-call forward).

    fc1/fc2 weights in bf16 (MXU inputs), biases in f32, fc3 kept in f32.
    Weights are stored [in, out] (transposed from PyTorch's [out, in]).
    """
    return {
        "w1": params["w1"].astype(compute_dtype),
        "b1": params["b1"].astype(jnp.float32),
        "w2": params["w2"].astype(compute_dtype),
        "b2": params["b2"].astype(jnp.float32),
        "w3": params["w3"].astype(jnp.float32),
        "b3": params["b3"].astype(jnp.float32),
    }


def regression_dnn_forward(x, params, *, batch_tile=4096):
    """Fused forward pass of RegressionDNN.

    x: [B, input_dim] float32.
    params: output of prepare_params() (w1[in,h1] bf16, b1[1,h1] f32, ...).
    Returns [B, out_dim] float32.
    """
    B, input_dim = x.shape
    h1 = params["w1"].shape[1]
    h2 = params["w2"].shape[1]
    out_dim = params["w3"].shape[1]

    # ---- batch tile selection ---------------------------------------------
    # Multiple of 8 (sublane), no bigger than the (rounded) batch, and capped
    # so large batches yield >=4 grid steps (v7x megacore + pipeline overlap).
    four_way = _round_up(_cdiv(B, 4), 8)
    bt = max(8, min(_round_up(batch_tile, 8), _round_up(B, 8), four_way))
    b_pad = _round_up(B, bt)

    # ---- minimal host-side padding (batch only, only when needed) ---------
    x_p = x if b_pad == B else jnp.pad(x, ((0, b_pad - B), (0, 0)))

    grid = (b_pad // bt,)

    def resident(shape):  # same full-extent block every step (weights/biases)
        return pl.BlockSpec(shape, lambda i: (0, 0))

    out = pl.pallas_call(
        _mlp_kernel,
        out_shape=jax.ShapeDtypeStruct((b_pad, out_dim), jnp.float32),
        grid=grid,
        in_specs=[
            pl.BlockSpec((bt, input_dim), lambda i: (i, 0)),  # x tile (streamed)
            resident((input_dim, h1)),                        # w1 (bf16)
            resident((1, h1)),                                # b1 (f32)
            resident((h1, h2)),                               # w2 (bf16)
            resident((1, h2)),                                # b2 (f32)
            resident((h2, out_dim)),                          # w3 (f32)
            resident((1, out_dim)),                           # b3 (f32)
        ],
        out_specs=pl.BlockSpec((bt, out_dim), lambda i: (i, 0)),
        compiler_params=pltpu.CompilerParams(
            dimension_semantics=("parallel",),
        ),
    )(x_p, params["w1"], params["b1"], params["w2"], params["b2"],
      params["w3"], params["b3"])

    return out[:B]


def init_params(key, input_dim, hidden_dim1=128, hidden_dim2=64, output_dim=1):
    """PyTorch-nn.Linear-style init (uniform +/- 1/sqrt(fan_in)); weights [in, out]."""
    ks = jax.random.split(key, 6)

    def linear(kw, kb, fan_in, fan_out):
        bound = 1.0 / jnp.sqrt(fan_in)
        w = jax.random.uniform(kw, (fan_in, fan_out), jnp.float32, -bound, bound)
        b = jax.random.uniform(kb, (1, fan_out), jnp.float32, -bound, bound)
        return w, b

    w1, b1 = linear(ks[0], ks[1], input_dim, hidden_dim1)
    w2, b2 = linear(ks[2], ks[3], hidden_dim1, hidden_dim2)
    w3, b3 = linear(ks[4], ks[5], hidden_dim2, output_dim)
    return {"w1": w1, "b1": b1, "w2": w2, "b2": b2, "w3": w3, "b3": b3}


def _reference_forward(x, p):
    h1 = jnp.maximum(x @ p["w1"] + p["b1"], 0.0)
    h2 = jnp.maximum(h1 @ p["w2"] + p["b2"], 0.0)
    return h2 @ p["w3"] + p["b3"]


if __name__ == "__main__":
    key = jax.random.PRNGKey(0)
    k_x, k_x2, k_p = jax.random.split(key, 3)

    input_dim = 32
    raw_params = init_params(k_p, input_dim, hidden_dim1=128, hidden_dim2=64,
                             output_dim=1)
    params = prepare_params(raw_params)          # one-time casts, not per call

    fwd = jax.jit(regression_dnn_forward, static_argnames=("batch_tile",))

    # Small batch (single tile).
    x = jax.random.normal(k_x, (8, input_dim), jnp.float32)
    y = jax.block_until_ready(fwd(x, params))
    y_ref = _reference_forward(x, raw_params)
    assert y.shape == (8, 1), y.shape
    assert float(jnp.max(jnp.abs(y - y_ref))) < 5e-2, "mismatch vs f32 reference"

    # Non-multiple batch: exercises the >=4-step grid cap (bt=80 -> 4 tiles),
    # batch padding, and the multi-step pipelined grid.
    x2 = jax.random.normal(k_x2, (300, input_dim), jnp.float32)
    y2 = jax.block_until_ready(fwd(x2, params, batch_tile=128))
    y2_ref = _reference_forward(x2, raw_params)
    assert y2.shape == (300, 1), y2.shape
    assert float(jnp.max(jnp.abs(y2 - y2_ref))) < 5e-2, "mismatch vs f32 reference"

    print("KERNEL_OK")
</pallas_src>

<mosaic_0001>
module attributes {stable_mosaic.version = 11 : i64} {
  func.func @_mlp_kernel(%arg0: i32, %arg1: memref<8x32xf32, #tpu.memory_space<vmem>>, %arg2: memref<32x128xbf16, #tpu.memory_space<vmem>>, %arg3: memref<1x128xf32, #tpu.memory_space<vmem>>, %arg4: memref<128x64xbf16, #tpu.memory_space<vmem>>, %arg5: memref<1x64xf32, #tpu.memory_space<vmem>>, %arg6: memref<64x1xf32, #tpu.memory_space<vmem>>, %arg7: memref<1x1xf32, #tpu.memory_space<vmem>>, %arg8: memref<8x1xf32, #tpu.memory_space<vmem>>) attributes {dimension_semantics = [#tpu.dimension_semantics<parallel>], iteration_bounds = array<i64: 1>, scalar_prefetch = 0 : i64, scratch_operands = 0 : i64, tpu.core_type = #tpu.core_type<tc>, window_params = [{transform_indices = @transform_0, window_bounds = array<i64: 8, 32>}, {pipeline_mode = #tpu.pipeline_mode<synchronous>, transform_indices = @transform_1, window_bounds = array<i64: 32, 128>}, {pipeline_mode = #tpu.pipeline_mode<synchronous>, transform_indices = @transform_2, window_bounds = array<i64: 1, 128>}, {pipeline_mode = #tpu.pipeline_mode<synchronous>, transform_indices = @transform_3, window_bounds = array<i64: 128, 64>}, {pipeline_mode = #tpu.pipeline_mode<synchronous>, transform_indices = @transform_4, window_bounds = array<i64: 1, 64>}, {pipeline_mode = #tpu.pipeline_mode<synchronous>, transform_indices = @transform_5, window_bounds = array<i64: 64, 1>}, {pipeline_mode = #tpu.pipeline_mode<synchronous>, transform_indices = @transform_6, window_bounds = array<i64: 1, 1>}, {transform_indices = @transform_7, window_bounds = array<i64: 8, 1>}]} {
    %c0 = arith.constant 0 : index
    %c0_0 = arith.constant 0 : index
    %0 = vector.load %arg1[%c0, %c0_0] : memref<8x32xf32, #tpu.memory_space<vmem>>, vector<8x32xf32>
    %1 = arith.truncf %0 : vector<8x32xf32> to vector<8x32xbf16>
    %c0_1 = arith.constant 0 : index
    %c0_2 = arith.constant 0 : index
    %2 = vector.load %arg2[%c0_1, %c0_2] : memref<32x128xbf16, #tpu.memory_space<vmem>>, vector<32x128xbf16>
    %cst = arith.constant dense<0.000000e+00> : vector<8x128xf32>
    %3 = tpu.matmul %1, %2, %cst {dimension_numbers = #tpu.dot_dimension_numbers<[1], [0], [0], [1], [0, 0, 1, 1], [], []>} : vector<8x32xbf16>, vector<32x128xbf16>, vector<8x128xf32> -> vector<8x128xf32>
    %c0_3 = arith.constant 0 : index
    %c0_4 = arith.constant 0 : index
    %4 = vector.load %arg3[%c0_3, %c0_4] : memref<1x128xf32, #tpu.memory_space<vmem>>, vector<1x128xf32>
    %5 = vector.broadcast %4 : vector<1x128xf32> to vector<8x128xf32>
    %6 = arith.addf %3, %5 : vector<8x128xf32>
    %cst_5 = arith.constant 0.000000e+00 : f32
    %7 = vector.broadcast %cst_5 : f32 to vector<8x128xf32>
    %8 = arith.maximumf %6, %7 : vector<8x128xf32>
    %9 = arith.truncf %8 : vector<8x128xf32> to vector<8x128xbf16>
    %c0_6 = arith.constant 0 : index
    %c0_7 = arith.constant 0 : index
    %10 = vector.load %arg4[%c0_6, %c0_7] : memref<128x64xbf16, #tpu.memory_space<vmem>>, vector<128x64xbf16>
    %cst_8 = arith.constant dense<0.000000e+00> : vector<8x64xf32>
    %11 = tpu.matmul %9, %10, %cst_8 {dimension_numbers = #tpu.dot_dimension_numbers<[1], [0], [0], [1], [0, 0, 1, 1], [], []>} : vector<8x128xbf16>, vector<128x64xbf16>, vector<8x64xf32> -> vector<8x64xf32>
    %c0_9 = arith.constant 0 : index
    %c0_10 = arith.constant 0 : index
    %12 = vector.load %arg5[%c0_9, %c0_10] : memref<1x64xf32, #tpu.memory_space<vmem>>, vector<1x64xf32>
    %13 = vector.broadcast %12 : vector<1x64xf32> to vector<8x64xf32>
    %14 = arith.addf %11, %13 : vector<8x64xf32>
    %cst_11 = arith.constant 0.000000e+00 : f32
    %15 = vector.broadcast %cst_11 : f32 to vector<8x64xf32>
    %16 = arith.maximumf %14, %15 : vector<8x64xf32>
    %c0_12 = arith.constant 0 : index
    %c0_13 = arith.constant 0 : index
    %17 = vector.load %arg6[%c0_12, %c0_13] : memref<64x1xf32, #tpu.memory_space<vmem>>, vector<64x1xf32>
    %cst_14 = arith.constant dense<0.000000e+00> : vector<8x1xf32>
    %18 = tpu.matmul %16, %17, %cst_14 {dimension_numbers = #tpu.dot_dimension_numbers<[1], [0], [0], [1], [0, 0, 1, 1], [], []>} : vector<8x64xf32>, vector<64x1xf32>, vector<8x1xf32> -> vector<8x1xf32>
    %c0_15 = arith.constant 0 : index
    %c0_16 = arith.constant 0 : index
    %19 = vector.load %arg7[%c0_15, %c0_16] : memref<1x1xf32, #tpu.memory_space<vmem>>, vector<1x1xf32>
    %20 = vector.broadcast %19 : vector<1x1xf32> to vector<8x1xf32>
    %21 = arith.addf %18, %20 : vector<8x1xf32>
    %c0_17 = arith.constant 0 : index
    %c0_18 = arith.constant 0 : index
    %22 = vector.load %arg8[%c0_17, %c0_18] : memref<8x1xf32, #tpu.memory_space<vmem>>, vector<8x1xf32>
    tpu.vector_store %arg8[%c0_17, %c0_18], %21 {strides = array<i32>} : memref<8x1xf32, #tpu.memory_space<vmem>>, vector<8x1xf32>,
    return
  }
  func.func @transform_0(%arg0: i32) -> (i32, i32) {
    %c0_i32 = arith.constant 0 : i32
    %c0_i32_0 = arith.constant 0 : i32
    return %arg0, %c0_i32 : i32, i32
  }
  func.func @transform_1(%arg0: i32) -> (i32, i32) {
    %c0_i32 = arith.constant 0 : i32
    %c0_i32_0 = arith.constant 0 : i32
    %c0_i32_1 = arith.constant 0 : i32
    return %c0_i32, %c0_i32_0 : i32, i32
  }
  func.func @transform_2(%arg0: i32) -> (i32, i32) {
    %c0_i32 = arith.constant 0 : i32
    %c0_i32_0 = arith.constant 0 : i32
    %c0_i32_1 = arith.constant 0 : i32
    return %c0_i32, %c0_i32_0 : i32, i32
  }
  func.func @transform_3(%arg0: i32) -> (i32, i32) {
    %c0_i32 = arith.constant 0 : i32
    %c0_i32_0 = arith.constant 0 : i32
    %c0_i32_1 = arith.constant 0 : i32
    return %c0_i32, %c0_i32_0 : i32, i32
  }
  func.func @transform_4(%arg0: i32) -> (i32, i32) {
    %c0_i32 = arith.constant 0 : i32
    %c0_i32_0 = arith.constant 0 : i32
    %c0_i32_1 = arith.constant 0 : i32
    return %c0_i32, %c0_i32_0 : i32, i32
  }
  func.func @transform_5(%arg0: i32) -> (i32, i32) {
    %c0_i32 = arith.constant 0 : i32
    %c0_i32_0 = arith.constant 0 : i32
    %c0_i32_1 = arith.constant 0 : i32
    return %c0_i32, %c0_i32_0 : i32, i32
  }
  func.func @transform_6(%arg0: i32) -> (i32, i32) {
    %c0_i32 = arith.constant 0 : i32
    %c0_i32_0 = arith.constant 0 : i32
    %c0_i32_1 = arith.constant 0 : i32
    return %c0_i32, %c0_i32_0 : i32, i32
  }
  func.func @transform_7(%arg0: i32) -> (i32, i32) {
    %c0_i32 = arith.constant 0 : i32
    %c0_i32_0 = arith.constant 0 : i32
    return %arg0, %c0_i32 : i32, i32
  }
}

</mosaic_0001>

<llo_original>
// kernel: regression_dnn_forward.1
$region0: #{regression_dnn_forward.1}
  #allocation0 [shape = 'u32[]', space=smem, size = 0x4, offset = 0x4, fixed_abs, tag = 'smem constant byte address 0x4 - core index']
  #allocation1 [shape = 'u32[144,128]{1,0:T(1,128)}', space=vmem, size = 0x12000, scoped, tag = 'internal scratch']
  #allocation2 [shape = 'f32[1,1]{1,0:T(1,128)S(1)}', space=vmem, size = 0x200, scoped, tag = 'scoped memory for regression_dnn_forward.1']
  %s0 = inlined_call_operand.vmem [shape: f32[8,32], index: 0, kind: input, shape index: {}]
  %s1 = inlined_call_operand.vmem [shape: bf16[32,128], index: 1, kind: input, shape index: {}]
  %s2 = inlined_call_operand.vmem [shape: f32[1,128], index: 2, kind: input, shape index: {}]
  %s3 = inlined_call_operand.vmem [shape: bf16[128,64], index: 3, kind: input, shape index: {}]
  %s4 = inlined_call_operand.vmem [shape: f32[1,64], index: 4, kind: input, shape index: {}]
  %s5 = inlined_call_operand.vmem [shape: f32[64,1], index: 5, kind: input, shape index: {}]
  %s6 = inlined_call_operand.<no memory space> [shape: f32[1,1], index: 6, kind: input, shape index: {}]
  %s7 = inlined_call_operand.vmem [shape: f32[8,1], index: 7, kind: output, shape index: {}]
  %s8 = sld [smem:[#allocation0]]
  $region38: #{regression_dnn_forward.1} parent=0
    _
  %s10 = ssub.s32 1, %s8
  %s11 = scalar_select 0, %s10, %s8
  %v12 = vstv %s6
  %13 = vst [vmem:[#allocation2] sm:$0x1] %v12
  // Predicated region
  $region2: #{regression_dnn_forward.1} parent=0 // pred_check
    _
  $region3: #{regression_dnn_forward.1} parent=0 // pred_check_branch
    %15 = sbr.rel (0) target = $region5
  $region4: #{regression_dnn_forward.1} parent=0 // pred_region
    _
  $region5: #{regression_dnn_forward.1} parent=0 // pred_fallthru
    _
  // Predicated region
  $region6: #{regression_dnn_forward.1} parent=0 // pred_check
    _
  $region7: #{regression_dnn_forward.1} parent=0 // pred_check_branch
    %17 = sbr.rel (0) target = $region9
  $region8: #{regression_dnn_forward.1} parent=0 // pred_region
    _
  $region9: #{regression_dnn_forward.1} parent=0 // pred_fallthru
    _
  // Predicated region
  $region10: #{regression_dnn_forward.1} parent=0 // pred_check
    _
  $region11: #{regression_dnn_forward.1} parent=0 // pred_check_branch
    %19 = sbr.rel (0) target = $region13
  $region12: #{regression_dnn_forward.1} parent=0 // pred_region
    _
  $region13: #{regression_dnn_forward.1} parent=0 // pred_fallthru
    _
  // Predicated region
  $region14: #{regression_dnn_forward.1} parent=0 // pred_check
    _
  $region15: #{regression_dnn_forward.1} parent=0 // pred_check_branch
    %21 = sbr.rel (0) target = $region17
  $region16: #{regression_dnn_forward.1} parent=0 // pred_region
    _
  $region17: #{regression_dnn_forward.1} parent=0 // pred_fallthru
    _
  // Predicated region
  $region18: #{regression_dnn_forward.1} parent=0 // pred_check
    _
  $region19: #{regression_dnn_forward.1} parent=0 // pred_check_branch
    %23 = sbr.rel (0) target = $region21
  $region20: #{regression_dnn_forward.1} parent=0 // pred_region
    _
  $region21: #{regression_dnn_forward.1} parent=0 // pred_fallthru
    _
  // Predicated region
  $region22: #{regression_dnn_forward.1} parent=0 // pred_check
    _
  $region23: #{regression_dnn_forward.1} parent=0 // pred_check_branch
    %25 = sbr.rel (0) target = $region25
  $region24: #{regression_dnn_forward.1} parent=0 // pred_region
    _
  $region25: #{regression_dnn_forward.1} parent=0 // pred_fallthru
    _
  // Predicated region
  $region26: #{regression_dnn_forward.1} parent=0 // pred_check
    _
  $region27: #{regression_dnn_forward.1} parent=0 // pred_check_branch
    %27 = sbr.rel (0) target = $region29
  $region28: #{regression_dnn_forward.1} parent=0 // pred_region
    _
  $region29: #{regression_dnn_forward.1} parent=0 // pred_fallthru
    _
  %v29 = vld [vmem:[%s0] sm:$0xff]
  %v30 = vpack.c.bf16 %v29, %v29
  %v31 = vld [vmem:[%s1] sm:$0xf]
  %v32 = vld [vmem:[%s1 + $0x4] sm:$0xf]
  %v33 = vld [vmem:[%s1 + $0x8] sm:$0xf]
  %v34 = vld [vmem:[%s1 + $0xc] sm:$0xf]
  %v35 = vld [vmem:[%s2] sm:$0x1]
  %v37 = vlaneseq
  %v38 = vshrl.u32 %v37, 7
  %v39 = vsub.s32 0, %v38
  %v40 = vrot.slane %v35, %v39
  %v46 = vunpack.c.l.b16 %v31
  %v47 = vunpack.c.l.b16 %v32
  %v48 = vunpack.c.l.b16 %v33
  %v49 = vunpack.c.l.b16 %v34
  %v50 = vpack.c.b16 %v47, %v46
  %v51 = vpack.c.b16 %v49, %v48
  %vm54 = vcmask 261120
  %v56 = vsel %vm54, %v30, 0
  %58 = vmatprep.subr.bf16.mxu0 0
  %59 = vmatpush1.bf16.msra.mxu0 %v50
  %60 = vmatprep.subr.bf16.mxu0 0
  %61 = vmatpush1.bf16.msra.mxu0 %v51
  %62 = vmatprep.subr.bf16.mxu0 0
  %63 = vmatpush1.bf16.msra.mxu0 0
  %64 = vmatprep.subr.bf16.mxu0 0
  %65 = vmatpush1.bf16.msra.mxu0 0
  %66 = vmatprep.subr.bf16.mxu0 0
  %67 = vmatpush1.bf16.msra.mxu0 0
  %68 = vmatprep.subr.bf16.mxu0 0
  %69 = vmatpush1.bf16.msra.mxu0 0
  %70 = vmatprep.subr.bf16.mxu0 0
  %71 = vmatpush1.bf16.msra.mxu0 0
  %72 = vmatprep.subr.bf16.mxu0 0
  %73 = vmatpush1.bf16.msra.mxu0 0
  %74 = vmatprep.subr.bf16.mxu0 0
  %75 = vmatpush1.bf16.msra.mxu0 0
  %76 = vmatprep.subr.bf16.mxu0 0
  %77 = vmatpush1.bf16.msra.mxu0 0
  %78 = vmatprep.subr.bf16.mxu0 0
  %79 = vmatpush1.bf16.msra.mxu0 0
  %80 = vmatprep.subr.bf16.mxu0 0
  %81 = vmatpush1.bf16.msra.mxu0 0
  %82 = vmatprep.subr.bf16.mxu0 0
  %83 = vmatpush1.bf16.msra.mxu0 0
  %84 = vmatprep.subr.bf16.mxu0 0
  %85 = vmatpush1.bf16.msra.mxu0 0
  %86 = vmatprep.subr.bf16.mxu0 0
  %87 = vmatpush1.bf16.msra.mxu0 0
  %88 = vmatprep.subr.bf16.mxu0 0
  %89 = vmatpush1.bf16.msra.mxu0 0
  %90 = vmatprep.mubr.bf16.mxu0 0
  %91 = vmatmul.mubr.bf16.gmra.mrb[0].mxu0 %v56
  %v92 = vpop.f32.mrb[0].mxu0
  %v93 = vadd.f32 %v40, %v92
  %v94 = vpop.f32.mrb[0].mxu0
  %v95 = vpop.f32.mrb[0].mxu0
  %v96 = vpop.f32.mrb[0].mxu0
  %97 = vdwg.mxu0
  %v98 = vmax.f32 %v93, 0.0
  %v99 = vpack.c.bf16 %v98, %v98
  %v100 = vld [vmem:[%s3] sm:$0xf]
  %v101 = vld [vmem:[%s3 + $0x4] sm:$0xf]
  %v102 = vld [vmem:[%s3 + $0x8] sm:$0xf]
  %v103 = vld [vmem:[%s3 + $0xc] sm:$0xf]
  %v104 = vld [vmem:[%s3 + $0x10] sm:$0xf]
  %v105 = vld [vmem:[%s3 + $0x14] sm:$0xf]
  %v106 = vld [vmem:[%s3 + $0x18] sm:$0xf]
  %v107 = vld [vmem:[%s3 + $0x1c] sm:$0xf]
  %v108 = vld [vmem:[%s3 + $0x20] sm:$0xf]
  %v109 = vld [vmem:[%s3 + $0x24] sm:$0xf]
  %v110 = vld [vmem:[%s3 + $0x28] sm:$0xf]
  %v111 = vld [vmem:[%s3 + $0x2c] sm:$0xf]
  %v112 = vld [vmem:[%s3 + $0x30] sm:$0xf]
  %v113 = vld [vmem:[%s3 + $0x34] sm:$0xf]
  %v114 = vld [vmem:[%s3 + $0x38] sm:$0xf]
  %v115 = vld [vmem:[%s3 + $0x3c] sm:$0xf]
  %v116 = vld [vmem:[%s4] sm:$0x1]
  %v118 = vlaneseq
  %v119 = vshrl.u32 %v118, 7
  %v120 = vsub.s32 0, %v119
  %v121 = vrot.slane %v116, %v120
  %v139 = vunpack.c.l.b16 %v100
  %v140 = vunpack.c.l.b16 %v101
  %v141 = vunpack.c.l.b16 %v102
  %v142 = vunpack.c.l.b16 %v103
  %v143 = vunpack.c.l.b16 %v104
  %v144 = vunpack.c.l.b16 %v105
  %v145 = vunpack.c.l.b16 %v106
  %v146 = vunpack.c.l.b16 %v107
  %v147 = vunpack.c.l.b16 %v108
  %v148 = vunpack.c.l.b16 %v109
  %v149 = vunpack.c.l.b16 %v110
  %v150 = vunpack.c.l.b16 %v111
  %v151 = vunpack.c.l.b16 %v112
  %v152 = vunpack.c.l.b16 %v113
  %v153 = vunpack.c.l.b16 %v114
  %v154 = vunpack.c.l.b16 %v115
  %v155 = vpack.c.b16 %v140, %v139
  %v156 = vpack.c.b16 %v142, %v141
  %v157 = vpack.c.b16 %v144, %v143
  %v158 = vpack.c.b16 %v146, %v145
  %v159 = vpack.c.b16 %v148, %v147
  %v160 = vpack.c.b16 %v150, %v149
  %v161 = vpack.c.b16 %v152, %v151
  %v162 = vpack.c.b16 %v154, %v153
  %171 = vmatprep.subr.bf16.mxu0 0
  %172 = vmatpush1.bf16.msra.mxu0 %v155
  %173 = vmatprep.subr.bf16.mxu0 0
  %174 = vmatpush1.bf16.msra.mxu0 %v156
  %175 = vmatprep.subr.bf16.mxu0 0
  %176 = vmatpush1.bf16.msra.mxu0 %v157
  %177 = vmatprep.subr.bf16.mxu0 0
  %178 = vmatpush1.bf16.msra.mxu0 %v158
  %179 = vmatprep.subr.bf16.mxu0 0
  %180 = vmatpush1.bf16.msra.mxu0 %v159
  %181 = vmatprep.subr.bf16.mxu0 0
  %182 = vmatpush1.bf16.msra.mxu0 %v160
  %183 = vmatprep.subr.bf16.mxu0 0
  %184 = vmatpush1.bf16.msra.mxu0 %v161
  %185 = vmatprep.subr.bf16.mxu0 0
  %186 = vmatpush1.bf16.msra.mxu0 %v162
  %187 = vmatprep.subr.bf16.mxu0 0
  %188 = vmatpush1.bf16.msra.mxu0 0
  %189 = vmatprep.subr.bf16.mxu0 0
  %190 = vmatpush1.bf16.msra.mxu0 0
  %191 = vmatprep.subr.bf16.mxu0 0
  %192 = vmatpush1.bf16.msra.mxu0 0
  %193 = vmatprep.subr.bf16.mxu0 0
  %194 = vmatpush1.bf16.msra.mxu0 0
  %195 = vmatprep.subr.bf16.mxu0 0
  %196 = vmatpush1.bf16.msra.mxu0 0
  %197 = vmatprep.subr.bf16.mxu0 0
  %198 = vmatpush1.bf16.msra.mxu0 0
  %199 = vmatprep.subr.bf16.mxu0 0
  %200 = vmatpush1.bf16.msra.mxu0 0
  %201 = vmatprep.subr.bf16.mxu0 0
  %202 = vmatpush1.bf16.msra.mxu0 0
  %203 = vmatprep.mubr.bf16.mxu0 0
  %204 = vmatmul.mubr.bf16.gmra.mrb[0].mxu0 %v99
  %v205 = vpop.f32.mrb[0].mxu0
  %v206 = vadd.f32 %v121, %v205
  %v207 = vpop.f32.mrb[0].mxu0
  %v208 = vpop.f32.mrb[0].mxu0
  %v209 = vpop.f32.mrb[0].mxu0
  %210 = vdwg.mxu0
  %v211 = vmax.f32 %v206, 0.0
  %v212 = vld [vmem:[%s5] sm:$0xff]
  %v213 = vld [vmem:[%s5 + $0x8] sm:$0xff]
  %v214 = vld [vmem:[%s5 + $0x10] sm:$0xff]
  %v215 = vld [vmem:[%s5 + $0x18] sm:$0xff]
  %v216 = vld [vmem:[%s5 + $0x20] sm:$0xff]
  %v217 = vld [vmem:[%s5 + $0x28] sm:$0xff]
  %v218 = vld [vmem:[%s5 + $0x30] sm:$0xff]
  %v219 = vld [vmem:[%s5 + $0x38] sm:$0xff]
  %v220 = vld [vmem:[#allocation2] sm:$0x1]
  %v222 = vlaneseq
  %v223 = vshrl.u32 %v222, 7
  %v224 = vsub.s32 0, %v223
  %v225 = vrot.slane %v220, %v224
  %vm227 = vcmask 523264
  %v229 = vsel %vm227, %v211, 0
  %231 = vmatprep.subr.mxu0 0.0
  %232 = vmatpush1.msra.mxu0 %v212
  %233 = vmatprep.subr.mxu0 0.0
  %234 = vmatpush1.msra.mxu0 %v213
  %235 = vmatprep.subr.mxu0 0.0
  %236 = vmatpush1.msra.mxu0 %v214
  %237 = vmatprep.subr.mxu0 0.0
  %238 = vmatpush1.msra.mxu0 %v215
  %239 = vmatprep.subr.mxu0 0.0
  %240 = vmatpush1.msra.mxu0 %v216
  %241 = vmatprep.subr.mxu0 0.0
  %242 = vmatpush1.msra.mxu0 %v217
  %243 = vmatprep.subr.mxu0 0.0
  %244 = vmatpush1.msra.mxu0 %v218
  %245 = vmatprep.subr.mxu0 0.0
  %246 = vmatpush1.msra.mxu0 %v219
  %247 = vmatprep.subr.mxu0 0.0
  %248 = vmatpush1.msra.mxu0 0.0
  %249 = vmatprep.subr.mxu0 0.0
  %250 = vmatpush1.msra.mxu0 0.0
  %251 = vmatprep.subr.mxu0 0.0
  %252 = vmatpush1.msra.mxu0 0.0
  %253 = vmatprep.subr.mxu0 0.0
  %254 = vmatpush1.msra.mxu0 0.0
  %255 = vmatprep.subr.mxu0 0.0
  %256 = vmatpush1.msra.mxu0 0.0
  %257 = vmatprep.subr.mxu0 0.0
  %258 = vmatpush1.msra.mxu0 0.0
  %259 = vmatprep.subr.mxu0 0.0
  %260 = vmatpush1.msra.mxu0 0.0
  %261 = vmatprep.subr.mxu0 0.0
  %262 = vmatpush1.msra.mxu0 0.0
  %263 = vmatprep.subr.mxu0 0.0
  %264 = vmatpush1.msra.mxu0 0.0
  %265 = vmatprep.subr.mxu0 0.0
  %266 = vmatpush1.msra.mxu0 0.0
  %267 = vmatprep.subr.mxu0 0.0
  %268 = vmatpush1.msra.mxu0 0.0
  %269 = vmatprep.subr.mxu0 0.0
  %270 = vmatpush1.msra.mxu0 0.0
  %271 = vmatprep.subr.mxu0 0.0
  %272 = vmatpush1.msra.mxu0 0.0
  %273 = vmatprep.subr.mxu0 0.0
  %274 = vmatpush1.msra.mxu0 0.0
  %275 = vmatprep.subr.mxu0 0.0
  %276 = vmatpush1.msra.mxu0 0.0
  %277 = vmatprep.subr.mxu0 0.0
  %278 = vmatpush1.msra.mxu0 0.0
  %279 = vmatprep.subr.mxu0 0.0
  %280 = vmatpush1.msra.mxu0 0.0
  %281 = vmatprep.subr.mxu0 0.0
  %282 = vmatpush1.msra.mxu0 0.0
  %283 = vmatprep.subr.mxu0 0.0
  %284 = vmatpush1.msra.mxu0 0.0
  %285 = vmatprep.subr.mxu0 0.0
  %286 = vmatpush1.msra.mxu0 0.0
  %287 = vmatprep.subr.mxu0 0.0
  %288 = vmatpush1.msra.mxu0 0.0
  %289 = vmatprep.subr.mxu0 0.0
  %290 = vmatpush1.msra.mxu0 0.0
  %291 = vmatprep.subr.mxu0 0.0
  %292 = vmatpush1.msra.mxu0 0.0
  %293 = vmatprep.subr.mxu0 0.0
  %294 = vmatpush1.msra.mxu0 0.0
  %295 = vmatprep.mubr.f32.mxu0 0.0
  %296 = vmatmul.mubr.f32.gmra.mrb[0].mxu0 %v229
  %v297 = vpop.f32.mrb[0].mxu0
  %v298 = vadd.f32 %v225, %v297
  %v299 = vpop.f32.mrb[0].mxu0
  %300 = vdwg.mxu0
  %vm301 = vcmask 7168
  %302 = vst.msk [vmem:[%s7] sm:$0xff] %vm301, %v298
  // Predicated region
  $region30: #{regression_dnn_forward.1} parent=0 // pred_check
    _
  $region31: #{regression_dnn_forward.1} parent=0 // pred_check_branch
    %304 = sbr.rel (0) target = $region33
  $region32: #{regression_dnn_forward.1} parent=0 // pred_region
    _
  $region33: #{regression_dnn_forward.1} parent=0 // pred_fallthru
    _
  // Predicated region
  $region34: #{regression_dnn_forward.1} parent=0 // pred_check
    _
  $region35: #{regression_dnn_forward.1} parent=0 // pred_check_branch
    %306 = sbr.rel (0) target = $region37
  $region36: #{regression_dnn_forward.1} parent=0 // pred_region
    _
  $region37: #{regression_dnn_forward.1} parent=0 // pred_fallthru
    _

</llo_original>
